<compile_context>
chip_gen: v7x
topology: tpu7x:2x2x1
jax: 0.10.0
libtpu: 0.0.40
codegen_flags: <defaults>
</compile_context>

<pallas_src>
import math

import jax
import jax.numpy as jnp
from jax.experimental import pallas as pl
from jax.experimental.pallas import tpu as pltpu


def _add_constant_kernel(c_ref, x_ref, o_ref):
    # c_ref: (1,) scalar in SMEM; x_ref / o_ref: VMEM tiles of identical shape.
    o_ref[...] = x_ref[...].astype(o_ref.dtype) + c_ref[0].astype(o_ref.dtype)


def _vmem_capacity_bytes():
    try:
        cap = int(pltpu.get_tpu_info().vmem_capacity_bytes)
        return max(cap, 32 << 20)
    except Exception:
        return 64 << 20  # conservative: v7x has 64 MiB VMEM per TensorCore


def _round_down(value, multiple):
    return max(multiple, (value // multiple) * multiple)


def add_constant(x, constant):
    """y = x + constant, computed in a single-pass Pallas TPU streaming kernel."""
    x = jnp.asarray(x)
    # Framework-style type promotion (matches torch: int tensor + 3.5 -> float).
    out_dtype = jnp.result_type(x, constant)
    shape = x.shape
    total = int(x.size)

    # Degenerate cases: nothing to stream through a kernel.
    if total == 0 or x.ndim == 0:
        return (x.astype(out_dtype) + jnp.asarray(constant, out_dtype)).astype(out_dtype)

    in_size = jnp.dtype(x.dtype).itemsize
    out_size = jnp.dtype(out_dtype).itemsize
    dsize = max(in_size, out_size)

    vmem = _vmem_capacity_bytes()
    # Per-buffer block target. Input + output are each double-buffered (~4x
    # block resident); cap at 8 MiB so v7x (64 MiB VMEM/TC) keeps Mosaic
    # scratch headroom -- the streaming roofline plateaus well before that.
    block_bytes = min(8 << 20, max(1 << 20, vmem // 8))

    last = shape[-1]
    use_flat = False
    x_view = None
    block_shape = None
    grid = None
    index_map = None

    if last % 128 == 0:
        # Lane-dense fast path: collapsing leading dims only -> metadata-only view.
        cols = last
        rows = total // cols
        x_view = x.reshape(rows, cols)
        row_bytes = cols * dsize
        if 8 * row_bytes <= block_bytes:
            tr = _round_down(block_bytes // row_bytes, 8)
            if tr >= rows:
                tr = rows  # full-extent block (legal for any row count)
            block_shape = (tr, cols)
            grid = (pl.cdiv(rows, tr),)
            index_map = lambda i: (i, 0)
        else:
            # A single 8-sublane slab of full rows is wider than a block: tile cols too.
            tc = _round_down(block_bytes // (8 * dsize), 128)
            tr = 8 if rows >= 8 else rows
            block_shape = (tr, tc)
            grid = (pl.cdiv(rows, tr), pl.cdiv(cols, tc))
            index_map = lambda i, j: (i, j)
    elif x.ndim == 1:
        # Ragged 1-D: no reshape at all; the partial tail block is masked automatically.
        use_flat = True
        x_view = x
    else:
        # Ragged trailing dim: keep the original last two dims as the block's
        # full-extent minor dims (legal even when not (8,128)-divisible) and
        # tile over the collapsed leading dims -> still metadata-only, no
        # pad / concat / relayout copies.
        h, w = shape[-2], shape[-1]
        lead = total // (h * w)
        hw_bytes = h * w * dsize
        if hw_bytes <= block_bytes:
            x_view = x.reshape(lead, h, w)
            tl = max(1, min(lead, block_bytes // hw_bytes))
            block_shape = (tl, h, w)
            grid = (pl.cdiv(lead, tl),)
            index_map = lambda i: (i, 0, 0)
        else:
            row_bytes = w * dsize
            th = _round_down(block_bytes // row_bytes, 8)
            if th >= h:
                th = h
            if th * row_bytes > vmem // 6:
                # Pathologically wide, unaligned trailing dim: fall back to a flat
                # 1-D stream (accepts one relayout copy instead of a VMEM OOM).
                use_flat = True
                x_view = x.reshape(total)
            else:
                x_view = x.reshape(lead, h, w)
                block_shape = (1, th, w)
                grid = (lead, pl.cdiv(h, th))
                index_map = lambda i, j: (i, j, 0)

    if use_flat:
        n = int(x_view.shape[0])
        tb = _round_down(block_bytes // dsize, 8 * 128)
        if tb >= n:
            tb = n  # full-extent block
        block_shape = (tb,)
        grid = (pl.cdiv(n, tb),)
        index_map = lambda i: (i,)

    # Raise the scoped-VMEM budget to match the actual 4x-block residency
    # (plus headroom), rather than shrinking blocks to per-generation defaults.
    actual_block_bytes = math.prod(block_shape) * dsize
    vmem_limit = int(min(vmem - (8 << 20),
                         max(4 * actual_block_bytes + (8 << 20), 32 << 20)))

    # Constant as a runtime SMEM scalar: f32 for floating outputs, i32 for
    # integer outputs (no precision loss through a forced f32 path).
    if jnp.issubdtype(out_dtype, jnp.floating):
        c_dtype = jnp.float32
    else:
        c_dtype = jnp.int32
    const_arr = jnp.asarray(constant).astype(c_dtype).reshape((1,))

    grid_rank = len(grid)
    y_view = pl.pallas_call(
        _add_constant_kernel,
        out_shape=jax.ShapeDtypeStruct(x_view.shape, out_dtype),
        grid_spec=pltpu.PrefetchScalarGridSpec(
            num_scalar_prefetch=0,
            grid=grid,
            in_specs=[
                pl.BlockSpec(memory_space=pltpu.MemorySpace.SMEM),  # constant
                pl.BlockSpec(block_shape, index_map),               # x tile
            ],
            out_specs=pl.BlockSpec(block_shape, index_map),
        ),
        compiler_params=pltpu.CompilerParams(
            dimension_semantics=("parallel",) * grid_rank,
            vmem_limit_bytes=vmem_limit,
        ),
        cost_estimate=pl.CostEstimate(
            flops=total,
            transcendentals=0,
            bytes_accessed=total * (in_size + out_size)),
    )(const_arr, x_view)

    return y_view.reshape(shape)


if __name__ == "__main__":
    key = jax.random.PRNGKey(0)
    k1, k2, k3, k4 = jax.random.split(key, 4)

    # NCHW-shaped example: ragged trailing dims -> full-extent minor-dim path.
    x = jax.random.normal(k1, (2, 4, 16, 16), dtype=jnp.float32)
    y = jax.block_until_ready(add_constant(x, 3.5))
    assert y.shape == x.shape and y.dtype == x.dtype
    assert jnp.allclose(y, x + 3.5, atol=1e-6, rtol=1e-6)

    # Ragged 3-D shape (AddConstant(-1.25)).
    x2 = jax.random.normal(k2, (3, 5, 7), dtype=jnp.float32)
    y2 = jax.block_until_ready(add_constant(x2, -1.25))
    assert y2.shape == x2.shape and y2.dtype == x2.dtype
    assert jnp.allclose(y2, x2 - 1.25, atol=1e-6, rtol=1e-6)

    # 128-aligned fast path (lane-dense (rows, cols) view).
    x3 = jax.random.normal(k3, (16, 256), dtype=jnp.float32)
    y3 = jax.block_until_ready(add_constant(x3, 0.75))
    assert y3.shape == x3.shape and y3.dtype == x3.dtype
    assert jnp.allclose(y3, x3 + 0.75, atol=1e-6, rtol=1e-6)

    # Ragged 1-D path + integer->float promotion (torch: int tensor + 2.5 -> float).
    x4 = jax.random.randint(k4, (1000,), -50, 50, dtype=jnp.int32)
    y4 = jax.block_until_ready(add_constant(x4, 2.5))
    assert y4.shape == x4.shape and y4.dtype == jnp.float32
    assert jnp.allclose(y4, x4.astype(jnp.float32) + 2.5, atol=1e-6, rtol=1e-6)

    print("KERNEL_OK")
</pallas_src>

<mosaic_0001>
module attributes {stable_mosaic.version = 11 : i64} {
  func.func @_add_constant_kernel(%arg0: i32, %arg1: memref<1xf32, #tpu.memory_space<smem>>, %arg2: memref<8x16x16xf32, #tpu.memory_space<vmem>>, %arg3: memref<8x16x16xf32, #tpu.memory_space<vmem>>) attributes {dimension_semantics = [#tpu.dimension_semantics<parallel>], iteration_bounds = array<i64: 1>, scalar_prefetch = 0 : i64, scratch_operands = 0 : i64, tpu.core_type = #tpu.core_type<tc>, window_params = [{transform_indices = @transform_0, window_bounds = array<i64: 1>}, {transform_indices = @transform_1, window_bounds = array<i64: 8, 16, 16>}, {transform_indices = @transform_2, window_bounds = array<i64: 8, 16, 16>}]} {
    %c0 = arith.constant 0 : index
    %c0_0 = arith.constant 0 : index
    %c0_1 = arith.constant 0 : index
    %0 = vector.load %arg2[%c0, %c0_0, %c0_1] : memref<8x16x16xf32, #tpu.memory_space<vmem>>, vector<8x16x16xf32>
    %c0_2 = arith.constant 0 : index
    %1 = memref.load %arg1[%c0_2] : memref<1xf32, #tpu.memory_space<smem>>
    %2 = vector.broadcast %1 : f32 to vector<8x16x16xf32>
    %3 = arith.addf %0, %2 : vector<8x16x16xf32>
    %c0_3 = arith.constant 0 : index
    %c0_4 = arith.constant 0 : index
    %c0_5 = arith.constant 0 : index
    %4 = vector.load %arg3[%c0_3, %c0_4, %c0_5] : memref<8x16x16xf32, #tpu.memory_space<vmem>>, vector<8x16x16xf32>
    tpu.vector_store %arg3[%c0_3, %c0_4, %c0_5], %3 {strides = array<i32>} : memref<8x16x16xf32, #tpu.memory_space<vmem>>, vector<8x16x16xf32>,
    return
  }
  func.func @transform_0(%arg0: i32) -> i32 {
    %c0_i32 = arith.constant 0 : i32
    %c0_i32_0 = arith.constant 0 : i32
    return %c0_i32 : i32
  }
  func.func @transform_1(%arg0: i32) -> (i32, i32, i32) {
    %c0_i32 = arith.constant 0 : i32
    %c0_i32_0 = arith.constant 0 : i32
    %c0_i32_1 = arith.constant 0 : i32
    return %arg0, %c0_i32, %c0_i32_0 : i32, i32, i32
  }
  func.func @transform_2(%arg0: i32) -> (i32, i32, i32) {
    %c0_i32 = arith.constant 0 : i32
    %c0_i32_0 = arith.constant 0 : i32
    %c0_i32_1 = arith.constant 0 : i32
    return %arg0, %c0_i32, %c0_i32_0 : i32, i32, i32
  }
}

</mosaic_0001>

<llo_original>
// kernel: tpu_custom_call.1
$region0: #{tpu_custom_call.1}
  #allocation0 [shape = 'u32[]', space=smem, size = 0x4, offset = 0x4, fixed_abs, tag = 'smem constant byte address 0x4 - core index']
  #allocation1 [shape = 'u32[144,128]{1,0:T(1,128)}', space=vmem, size = 0x12000, scoped, tag = 'internal scratch']
  #allocation2 [shape = 'f32[1]{0:T(128)S(6)}', space=smem, size = 0x200, scoped, tag = 'scoped memory for tpu_custom_call.1']
  %s0 = inlined_call_operand.<no memory space> [shape: f32[1], index: 0, kind: input, shape index: {}]
  %s1 = inlined_call_operand.hbm [shape: f32[8,16,16], index: 1, kind: input, shape index: {}]
  %s2 = inlined_call_operand.hbm [shape: f32[8,16,16], index: 2, kind: output, shape index: {}]
  %s3 = sld [smem:[#allocation0]]
  $region22: #{tpu_custom_call.1} parent=0
    _
  %s5 = ssub.s32 1, %s3
  %s6 = scalar_select 0, %s5, %s3
  %7 = sst [smem:[#allocation2]] %s0
  $region1: #{tpu_custom_call.1} parent=0
    #allocation3 [shape = 'u8[65536]{0}', space=vmem, size = 0x10000, scoped, tag = 'input window, operand 1, single buffered']
    #allocation4 [shape = 's32[1]{0}', space=sflag, size = 0x4, scoped, tag = 'scoped memory for tpu_custom_call.1']
    #allocation5 [shape = 's32[1]{0}', space=sflag, size = 0x4, scoped, tag = 'scoped memory for tpu_custom_call.1']
    #allocation6 [shape = 'u8[65536]{0}', space=vmem, size = 0x10000, scoped, tag = 'output window, operand 0, single buffered']
    %8 = vsyncpa [#allocation4], 0
    %9 = vsyncpa [#allocation5], 0
    // Predicated region
    $region2: #{tpu_custom_call.1} parent=1 // pred_check
      _
    $region3: #{tpu_custom_call.1} parent=1 // pred_check_branch
      %11 = sbr.rel (0) target = $region5
    $region4: #{tpu_custom_call.1} parent=1 // pred_region
      _
    $region5: #{tpu_custom_call.1} parent=1 // pred_fallthru
      _
    // Predicated region
    $region6: #{tpu_custom_call.1} parent=1 // pred_check
      _
    $region7: #{tpu_custom_call.1} parent=1 // pred_check_branch
      %13 = sbr.rel (0) target = $region9
    $region8: #{tpu_custom_call.1} parent=1 // pred_region
      %s15 = ssub.s32 2048, 2048
      %16 = vsyncadd [#allocation4], %s15
      %s17 = sshll.u32 [#allocation3], 4
      %s18 = int_to_ptr.vmem [resolvable:$true] %s17
      %23 = dma.hbm_to_vmem [thread:$0]  %s1, 2048, %s18, [#allocation4], 128, 128, 8
    $region9: #{tpu_custom_call.1} parent=1 // pred_fallthru
      _
    // Predicated region
    $region10: #{tpu_custom_call.1} parent=1 // pred_check
      _
    $region11: #{tpu_custom_call.1} parent=1 // pred_check_branch
      %25 = sbr.rel (0) target = $region13
    $region12: #{tpu_custom_call.1} parent=1 // pred_region
      %26 = dma.done [#allocation4], 2048
    $region13: #{tpu_custom_call.1} parent=1 // pred_fallthru
      _
    %v27 = vld [vmem:[#allocation3] sm:$0xff]
    %v28 = vld [vmem:[#allocation3 + $0x8] sm:$0xff]
    %v29 = vld [vmem:[#allocation3 + $0x10] sm:$0xff]
    %v30 = vld [vmem:[#allocation3 + $0x18] sm:$0xff]
    %v31 = vld [vmem:[#allocation3 + $0x20] sm:$0xff]
    %v32 = vld [vmem:[#allocation3 + $0x28] sm:$0xff]
    %v33 = vld [vmem:[#allocation3 + $0x30] sm:$0xff]
    %v34 = vld [vmem:[#allocation3 + $0x38] sm:$0xff]
    %v35 = vld [vmem:[#allocation3 + $0x40] sm:$0xff]
    %v36 = vld [vmem:[#allocation3 + $0x48] sm:$0xff]
    %v37 = vld [vmem:[#allocation3 + $0x50] sm:$0xff]
    %v38 = vld [vmem:[#allocation3 + $0x58] sm:$0xff]
    %v39 = vld [vmem:[#allocation3 + $0x60] sm:$0xff]
    %v40 = vld [vmem:[#allocation3 + $0x68] sm:$0xff]
    %v41 = vld [vmem:[#allocation3 + $0x70] sm:$0xff]
    %v42 = vld [vmem:[#allocation3 + $0x78] sm:$0xff]
    %s43 = sld [smem:[#allocation2]]
    %v44 = vstv %s43
    %v45 = vadd.f32 %v27, %v44
    %v46 = vadd.f32 %v28, %v44
    %v47 = vadd.f32 %v29, %v44
    %v48 = vadd.f32 %v30, %v44
    %v49 = vadd.f32 %v31, %v44
    %v50 = vadd.f32 %v32, %v44
    %v51 = vadd.f32 %v33, %v44
    %v52 = vadd.f32 %v34, %v44
    %v53 = vadd.f32 %v35, %v44
    %v54 = vadd.f32 %v36, %v44
    %v55 = vadd.f32 %v37, %v44
    %v56 = vadd.f32 %v38, %v44
    %v57 = vadd.f32 %v39, %v44
    %v58 = vadd.f32 %v40, %v44
    %v59 = vadd.f32 %v41, %v44
    %v60 = vadd.f32 %v42, %v44
    %vm61 = vcmask 130048
    %62 = vst.msk [vmem:[#allocation6] sm:$0xff] %vm61, %v45
    %63 = vst.msk [vmem:[#allocation6 + $0x8] sm:$0xff] %vm61, %v46
    %64 = vst.msk [vmem:[#allocation6 + $0x10] sm:$0xff] %vm61, %v47
    %65 = vst.msk [vmem:[#allocation6 + $0x18] sm:$0xff] %vm61, %v48
    %66 = vst.msk [vmem:[#allocation6 + $0x20] sm:$0xff] %vm61, %v49
    %67 = vst.msk [vmem:[#allocation6 + $0x28] sm:$0xff] %vm61, %v50
    %68 = vst.msk [vmem:[#allocation6 + $0x30] sm:$0xff] %vm61, %v51
    %69 = vst.msk [vmem:[#allocation6 + $0x38] sm:$0xff] %vm61, %v52
    %70 = vst.msk [vmem:[#allocation6 + $0x40] sm:$0xff] %vm61, %v53
    %71 = vst.msk [vmem:[#allocation6 + $0x48] sm:$0xff] %vm61, %v54
    %72 = vst.msk [vmem:[#allocation6 + $0x50] sm:$0xff] %vm61, %v55
    %73 = vst.msk [vmem:[#allocation6 + $0x58] sm:$0xff] %vm61, %v56
    %74 = vst.msk [vmem:[#allocation6 + $0x60] sm:$0xff] %vm61, %v57
    %75 = vst.msk [vmem:[#allocation6 + $0x68] sm:$0xff] %vm61, %v58
    %76 = vst.msk [vmem:[#allocation6 + $0x70] sm:$0xff] %vm61, %v59
    %77 = vst.msk [vmem:[#allocation6 + $0x78] sm:$0xff] %vm61, %v60
    // Predicated region
    $region14: #{tpu_custom_call.1} parent=1 // pred_check
      _
    $region15: #{tpu_custom_call.1} parent=1 // pred_check_branch
      %79 = sbr.rel (0) target = $region17
    $region16: #{tpu_custom_call.1} parent=1 // pred_region
      %s81 = ssub.s32 2048, 2048
      %82 = vsyncadd [#allocation5], %s81
      %s83 = sshll.u32 [#allocation6], 4
      %s84 = int_to_ptr.vmem [resolvable:$true] %s83
      %89 = dma.vmem_to_hbm [thread:$0]  %s84, 2048, %s2, [#allocation5], 128, 128, 8
    $region17: #{tpu_custom_call.1} parent=1 // pred_fallthru
      _
    // Predicated region
    $region18: #{tpu_custom_call.1} parent=1 // pred_check
      _
    $region19: #{tpu_custom_call.1} parent=1 // pred_check_branch
      %91 = sbr.rel (0) target = $region21
    $region20: #{tpu_custom_call.1} parent=1 // pred_region
      %92 = dma.done [#allocation5], 2048
    $region21: #{tpu_custom_call.1} parent=1 // pred_fallthru
      _
    %93 = vsyncpa [#allocation4], 1
    %94 = vsyncpa [#allocation5], 1

</llo_original>
